<compile_context>
chip_gen: v7x
topology: tpu7x:2x2x1
jax: 0.10.0
libtpu: 0.0.40
codegen_flags: <defaults>
</compile_context>

<pallas_src>
import math

import jax
import jax.numpy as jnp
from jax.experimental import pallas as pl
from jax.experimental.pallas import tpu as pltpu


def _round_up(x, m):
    return (x + m - 1) // m * m


def nnmf_kernel(ut_ref, vt_ref, w1a_ref, w1b_ref, w1c_ref, b1_ref,
                w2_ref, b2_ref, w3h_ref, bias_ref, out_ref):
    ut = ut_ref[...]                              # (E, TB)  batch on lanes
    vt = vt_ref[...]                              # (E, TB)
    inter = ut * vt                               # (E, TB)

    # 0.5 * sum_e(u*v) per batch element: sublane reduce -> (1, TB)
    half_ratings = 0.5 * jnp.sum(inter, axis=0, keepdims=True)

    # Layer 1: concat([u, v, u*v]) @ W1 split into three dots (no concat).
    x1 = jnp.tanh(
        jnp.dot(w1a_ref[...], ut, preferred_element_type=jnp.float32)
        + jnp.dot(w1b_ref[...], vt, preferred_element_type=jnp.float32)
        + jnp.dot(w1c_ref[...], inter, preferred_element_type=jnp.float32)
        + b1_ref[...])                            # (H, TB)

    # Layer 2
    x2 = jnp.tanh(
        jnp.dot(w2_ref[...], x1, preferred_element_type=jnp.float32)
        + b2_ref[...])                            # (H, TB)

    # Layer 3 (weight pre-scaled by 0.5); bias_ref already = ub + ib + 0.5*b3.
    x3_half = jnp.dot(w3h_ref[...], x2,
                      preferred_element_type=jnp.float32)   # (1, TB)

    out_ref[...] = half_ratings + x3_half + bias_ref[...]   # lane-dense (1, TB)


def nnmf_forward(x_ids, params, *, block_b=512):
    """x_ids: int32 (B, 2) of [user_id, item_id]. Returns (B,) float32."""
    user_id = x_ids[:, 0]
    item_id = x_ids[:, 1]
    B = user_id.shape[0]
    E = params["user_embedding"].shape[1]
    H = params["w2"].shape[1]

    # Batch tile: lane-dense (multiple of 128), capped at block_b.
    TB = min(block_b, _round_up(B, 128))
    B_pad = _round_up(B, TB)
    G = B_pad // TB
    pad = B_pad - B

    # Gather glue (padded rows reuse id 0; their outputs are sliced off).
    uid = jnp.pad(user_id, (0, pad))
    iid = jnp.pad(item_id, (0, pad))
    ut = params["user_embedding"][uid].T          # (E, B_pad)
    vt = params["item_embedding"][iid].T          # (E, B_pad)

    # Per-row scalar bias folded into one lane-dense operand: ub + ib + 0.5*b3
    bias_row = (params["user_bias"][uid, 0]
                + params["item_bias"][iid, 0]
                + 0.5 * params["b3"][0, 0]).reshape(G, 1, TB)

    # Pre-transposed / pre-split / pre-scaled weights (tiny, done once in XLA).
    w1 = params["w1"]                             # (3E, H)
    w1a_t = w1[:E].T                              # (H, E)
    w1b_t = w1[E:2 * E].T                         # (H, E)
    w1c_t = w1[2 * E:].T                          # (H, E)
    b1_c = params["b1"].T                         # (H, 1)
    w2_t = params["w2"].T                         # (H, H)
    b2_c = params["b2"].T                         # (H, 1)
    w3h_t = 0.5 * params["w3"].T                  # (1, H)

    def col_spec(shape):                          # batch-tiled, batch on lanes
        return pl.BlockSpec(shape, lambda i: (0, i))

    def const_spec(shape):                        # resident across the grid
        return pl.BlockSpec(shape, lambda i, n=len(shape): (0,) * n)

    def row_spec():                               # (G, 1, TB) -> kernel (1, TB)
        return pl.BlockSpec((pl.Squeezed(), 1, TB), lambda i: (i, 0, 0))

    out = pl.pallas_call(
        nnmf_kernel,
        out_shape=jax.ShapeDtypeStruct((G, 1, TB), jnp.float32),
        grid=(G,),
        in_specs=[
            col_spec((E, TB)),     # u^T tile
            col_spec((E, TB)),     # v^T tile
            const_spec((H, E)),    # W1 (user part)^T
            const_spec((H, E)),    # W1 (item part)^T
            const_spec((H, E)),    # W1 (interaction part)^T
            const_spec((H, 1)),    # b1
            const_spec((H, H)),    # W2^T
            const_spec((H, 1)),    # b2
            const_spec((1, H)),    # 0.5 * W3^T
            row_spec(),            # ub + ib + 0.5*b3
        ],
        out_specs=row_spec(),
        compiler_params=pltpu.CompilerParams(
            dimension_semantics=("parallel",)),
    )(ut, vt, w1a_t, w1b_t, w1c_t, b1_c, w2_t, b2_c, w3h_t, bias_row)

    return out.reshape(-1)[:B]


def init_params(key, n_user, n_item, embedding_size=32, hidden_size=64):
    keys = jax.random.split(key, 8)

    def xavier_uniform(k, shape):
        bound = math.sqrt(6.0 / (shape[0] + shape[1]))
        return jax.random.uniform(k, shape, jnp.float32, -bound, bound)

    def linear_init(kw, kb, fan_in, fan_out):
        # PyTorch nn.Linear default init: U(-1/sqrt(fan_in), 1/sqrt(fan_in))
        bound = 1.0 / math.sqrt(fan_in)
        w = jax.random.uniform(kw, (fan_in, fan_out), jnp.float32, -bound, bound)
        b = jax.random.uniform(kb, (1, fan_out), jnp.float32, -bound, bound)
        return w, b

    w1, b1 = linear_init(keys[2], keys[3], embedding_size * 3, hidden_size)
    w2, b2 = linear_init(keys[4], keys[5], hidden_size, hidden_size)
    w3, b3 = linear_init(keys[6], keys[7], hidden_size, 1)

    return {
        "user_embedding": xavier_uniform(keys[0], (n_user, embedding_size)),
        "item_embedding": xavier_uniform(keys[1], (n_item, embedding_size)),
        "w1": w1, "b1": b1,
        "w2": w2, "b2": b2,
        "w3": w3, "b3": b3,
        "user_bias": jnp.zeros((n_user, 1), jnp.float32),
        "item_bias": jnp.zeros((n_item, 1), jnp.float32),
    }


def nnmf_reference(x_ids, params):
    user_id = x_ids[:, 0]
    item_id = x_ids[:, 1]
    u = params["user_embedding"][user_id]
    v = params["item_embedding"][item_id]
    inter = u * v
    ratings = jnp.sum(inter, axis=1)
    x = jnp.concatenate([u, v, inter], axis=1)
    x1 = jnp.tanh(x @ params["w1"] + params["b1"])
    x2 = jnp.tanh(x1 @ params["w2"] + params["b2"])
    x3 = (x2 @ params["w3"] + params["b3"]).reshape(-1)
    ub = params["user_bias"][user_id].reshape(-1)
    ib = params["item_bias"][item_id].reshape(-1)
    return (ratings + x3) / 2.0 + ub + ib


if __name__ == "__main__":
    n_user, n_item = 50, 40
    embedding_size, hidden_size = 32, 64
    batch = 8

    key = jax.random.PRNGKey(0)
    k_params, k_u, k_i = jax.random.split(key, 3)

    params = init_params(k_params, n_user, n_item, embedding_size, hidden_size)

    user_ids = jax.random.randint(k_u, (batch, 1), 0, n_user, dtype=jnp.int32)
    item_ids = jax.random.randint(k_i, (batch, 1), 0, n_item, dtype=jnp.int32)
    x_ids = jnp.concatenate([user_ids, item_ids], axis=1)   # (B, 2)

    out = jax.jit(nnmf_forward)(x_ids, params)
    out = jax.block_until_ready(out)

    ref = nnmf_reference(x_ids, params)
    assert out.shape == (batch,)
    assert jnp.allclose(out, ref, atol=1e-5, rtol=1e-5), (out, ref)

    print("KERNEL_OK")
</pallas_src>

<mosaic_0001>
module attributes {stable_mosaic.version = 11 : i64} {
  func.func @nnmf_kernel(%arg0: i32, %arg1: memref<32x128xf32, #tpu.memory_space<vmem>>, %arg2: memref<32x128xf32, #tpu.memory_space<vmem>>, %arg3: memref<64x32xf32, #tpu.memory_space<vmem>>, %arg4: memref<64x32xf32, #tpu.memory_space<vmem>>, %arg5: memref<64x32xf32, #tpu.memory_space<vmem>>, %arg6: memref<64x1xf32, #tpu.memory_space<vmem>>, %arg7: memref<64x64xf32, #tpu.memory_space<vmem>>, %arg8: memref<64x1xf32, #tpu.memory_space<vmem>>, %arg9: memref<1x64xf32, #tpu.memory_space<vmem>>, %arg10: memref<1x1x128xf32, #tpu.memory_space<vmem>>, %arg11: memref<1x1x128xf32, #tpu.memory_space<vmem>>) attributes {dimension_semantics = [#tpu.dimension_semantics<parallel>], iteration_bounds = array<i64: 1>, scalar_prefetch = 0 : i64, scratch_operands = 0 : i64, tpu.core_type = #tpu.core_type<tc>, window_params = [{transform_indices = @transform_0, window_bounds = array<i64: 32, 128>}, {transform_indices = @transform_1, window_bounds = array<i64: 32, 128>}, {pipeline_mode = #tpu.pipeline_mode<synchronous>, transform_indices = @transform_2, window_bounds = array<i64: 64, 32>}, {pipeline_mode = #tpu.pipeline_mode<synchronous>, transform_indices = @transform_3, window_bounds = array<i64: 64, 32>}, {pipeline_mode = #tpu.pipeline_mode<synchronous>, transform_indices = @transform_4, window_bounds = array<i64: 64, 32>}, {pipeline_mode = #tpu.pipeline_mode<synchronous>, transform_indices = @transform_5, window_bounds = array<i64: 64, 1>}, {pipeline_mode = #tpu.pipeline_mode<synchronous>, transform_indices = @transform_6, window_bounds = array<i64: 64, 64>}, {pipeline_mode = #tpu.pipeline_mode<synchronous>, transform_indices = @transform_7, window_bounds = array<i64: 64, 1>}, {pipeline_mode = #tpu.pipeline_mode<synchronous>, transform_indices = @transform_8, window_bounds = array<i64: 1, 64>}, {transform_indices = @transform_9, window_bounds = array<i64: 1, 1, 128>}, {transform_indices = @transform_10, window_bounds = array<i64: 1, 1, 128>}]} {
    %c0 = arith.constant 0 : index
    %c0_0 = arith.constant 0 : index
    %0 = vector.load %arg1[%c0, %c0_0] : memref<32x128xf32, #tpu.memory_space<vmem>>, vector<32x128xf32>
    %c0_1 = arith.constant 0 : index
    %c0_2 = arith.constant 0 : index
    %1 = vector.load %arg2[%c0_1, %c0_2] : memref<32x128xf32, #tpu.memory_space<vmem>>, vector<32x128xf32>
    %2 = arith.mulf %0, %1 : vector<32x128xf32>
    %cst = arith.constant dense<0.000000e+00> : vector<128xf32>
    %3 = vector.multi_reduction <add>, %2, %cst [0] : vector<32x128xf32> to vector<128xf32>
    %4 = vector.shape_cast %3 : vector<128xf32> to vector<1x128xf32>
    %cst_3 = arith.constant 5.000000e-01 : f32
    %5 = vector.broadcast %cst_3 : f32 to vector<1x128xf32>
    %6 = arith.mulf %5, %4 : vector<1x128xf32>
    %c0_4 = arith.constant 0 : index
    %c0_5 = arith.constant 0 : index
    %7 = vector.load %arg3[%c0_4, %c0_5] : memref<64x32xf32, #tpu.memory_space<vmem>>, vector<64x32xf32>
    %cst_6 = arith.constant dense<0.000000e+00> : vector<64x128xf32>
    %8 = tpu.matmul %7, %0, %cst_6 {dimension_numbers = #tpu.dot_dimension_numbers<[1], [0], [0], [1], [0, 0, 1, 1], [], []>} : vector<64x32xf32>, vector<32x128xf32>, vector<64x128xf32> -> vector<64x128xf32>
    %c0_7 = arith.constant 0 : index
    %c0_8 = arith.constant 0 : index
    %9 = vector.load %arg4[%c0_7, %c0_8] : memref<64x32xf32, #tpu.memory_space<vmem>>, vector<64x32xf32>
    %cst_9 = arith.constant dense<0.000000e+00> : vector<64x128xf32>
    %10 = tpu.matmul %9, %1, %cst_9 {dimension_numbers = #tpu.dot_dimension_numbers<[1], [0], [0], [1], [0, 0, 1, 1], [], []>} : vector<64x32xf32>, vector<32x128xf32>, vector<64x128xf32> -> vector<64x128xf32>
    %11 = arith.addf %8, %10 : vector<64x128xf32>
    %c0_10 = arith.constant 0 : index
    %c0_11 = arith.constant 0 : index
    %12 = vector.load %arg5[%c0_10, %c0_11] : memref<64x32xf32, #tpu.memory_space<vmem>>, vector<64x32xf32>
    %cst_12 = arith.constant dense<0.000000e+00> : vector<64x128xf32>
    %13 = tpu.matmul %12, %2, %cst_12 {dimension_numbers = #tpu.dot_dimension_numbers<[1], [0], [0], [1], [0, 0, 1, 1], [], []>} : vector<64x32xf32>, vector<32x128xf32>, vector<64x128xf32> -> vector<64x128xf32>
    %14 = arith.addf %11, %13 : vector<64x128xf32>
    %c0_13 = arith.constant 0 : index
    %c0_14 = arith.constant 0 : index
    %15 = vector.load %arg6[%c0_13, %c0_14] : memref<64x1xf32, #tpu.memory_space<vmem>>, vector<64x1xf32>
    %16 = vector.broadcast %15 : vector<64x1xf32> to vector<64x128xf32>
    %17 = arith.addf %14, %16 : vector<64x128xf32>
    %18 = math.tanh %17 : vector<64x128xf32>
    %c0_15 = arith.constant 0 : index
    %c0_16 = arith.constant 0 : index
    %19 = vector.load %arg7[%c0_15, %c0_16] : memref<64x64xf32, #tpu.memory_space<vmem>>, vector<64x64xf32>
    %cst_17 = arith.constant dense<0.000000e+00> : vector<64x128xf32>
    %20 = tpu.matmul %19, %18, %cst_17 {dimension_numbers = #tpu.dot_dimension_numbers<[1], [0], [0], [1], [0, 0, 1, 1], [], []>} : vector<64x64xf32>, vector<64x128xf32>, vector<64x128xf32> -> vector<64x128xf32>
    %c0_18 = arith.constant 0 : index
    %c0_19 = arith.constant 0 : index
    %21 = vector.load %arg8[%c0_18, %c0_19] : memref<64x1xf32, #tpu.memory_space<vmem>>, vector<64x1xf32>
    %22 = vector.broadcast %21 : vector<64x1xf32> to vector<64x128xf32>
    %23 = arith.addf %20, %22 : vector<64x128xf32>
    %24 = math.tanh %23 : vector<64x128xf32>
    %c0_20 = arith.constant 0 : index
    %c0_21 = arith.constant 0 : index
    %25 = vector.load %arg9[%c0_20, %c0_21] : memref<1x64xf32, #tpu.memory_space<vmem>>, vector<1x64xf32>
    %cst_22 = arith.constant dense<0.000000e+00> : vector<1x128xf32>
    %26 = tpu.matmul %25, %24, %cst_22 {dimension_numbers = #tpu.dot_dimension_numbers<[1], [0], [0], [1], [0, 0, 1, 1], [], []>} : vector<1x64xf32>, vector<64x128xf32>, vector<1x128xf32> -> vector<1x128xf32>
    %27 = arith.addf %6, %26 : vector<1x128xf32>
    %c0_23 = arith.constant 0 : index
    %c0_24 = arith.constant 0 : index
    %c0_25 = arith.constant 0 : index
    %28 = vector.load %arg10[%c0_23, %c0_24, %c0_25] : memref<1x1x128xf32, #tpu.memory_space<vmem>>, vector<1x1x128xf32>
    %29 = vector.shape_cast %28 : vector<1x1x128xf32> to vector<1x128xf32>
    %30 = arith.addf %27, %29 : vector<1x128xf32>
    %c0_26 = arith.constant 0 : index
    %c0_27 = arith.constant 0 : index
    %c0_28 = arith.constant 0 : index
    %31 = vector.load %arg11[%c0_26, %c0_27, %c0_28] : memref<1x1x128xf32, #tpu.memory_space<vmem>>, vector<1x1x128xf32>
    %32 = vector.shape_cast %31 : vector<1x1x128xf32> to vector<1x128xf32>
    %33 = vector.shape_cast %30 : vector<1x128xf32> to vector<1x1x128xf32>
    tpu.vector_store %arg11[%c0_26, %c0_27, %c0_28], %33 {strides = array<i32>} : memref<1x1x128xf32, #tpu.memory_space<vmem>>, vector<1x1x128xf32>,
    return
  }
  func.func @transform_0(%arg0: i32) -> (i32, i32) {
    %c0_i32 = arith.constant 0 : i32
    %c0_i32_0 = arith.constant 0 : i32
    return %c0_i32, %arg0 : i32, i32
  }
  func.func @transform_1(%arg0: i32) -> (i32, i32) {
    %c0_i32 = arith.constant 0 : i32
    %c0_i32_0 = arith.constant 0 : i32
    return %c0_i32, %arg0 : i32, i32
  }
  func.func @transform_2(%arg0: i32) -> (i32, i32) {
    %c0_i32 = arith.constant 0 : i32
    %c0_i32_0 = arith.constant 0 : i32
    %c0_i32_1 = arith.constant 0 : i32
    return %c0_i32, %c0_i32_0 : i32, i32
  }
  func.func @transform_3(%arg0: i32) -> (i32, i32) {
    %c0_i32 = arith.constant 0 : i32
    %c0_i32_0 = arith.constant 0 : i32
    %c0_i32_1 = arith.constant 0 : i32
    return %c0_i32, %c0_i32_0 : i32, i32
  }
  func.func @transform_4(%arg0: i32) -> (i32, i32) {
    %c0_i32 = arith.constant 0 : i32
    %c0_i32_0 = arith.constant 0 : i32
    %c0_i32_1 = arith.constant 0 : i32
    return %c0_i32, %c0_i32_0 : i32, i32
  }
  func.func @transform_5(%arg0: i32) -> (i32, i32) {
    %c0_i32 = arith.constant 0 : i32
    %c0_i32_0 = arith.constant 0 : i32
    %c0_i32_1 = arith.constant 0 : i32
    return %c0_i32, %c0_i32_0 : i32, i32
  }
  func.func @transform_6(%arg0: i32) -> (i32, i32) {
    %c0_i32 = arith.constant 0 : i32
    %c0_i32_0 = arith.constant 0 : i32
    %c0_i32_1 = arith.constant 0 : i32
    return %c0_i32, %c0_i32_0 : i32, i32
  }
  func.func @transform_7(%arg0: i32) -> (i32, i32) {
    %c0_i32 = arith.constant 0 : i32
    %c0_i32_0 = arith.constant 0 : i32
    %c0_i32_1 = arith.constant 0 : i32
    return %c0_i32, %c0_i32_0 : i32, i32
  }
  func.func @transform_8(%arg0: i32) -> (i32, i32) {
    %c0_i32 = arith.constant 0 : i32
    %c0_i32_0 = arith.constant 0 : i32
    %c0_i32_1 = arith.constant 0 : i32
    return %c0_i32, %c0_i32_0 : i32, i32
  }
  func.func @transform_9(%arg0: i32) -> (i32, i32, i32) {
    %c0_i32 = arith.constant 0 : i32
    %c0_i32_0 = arith.constant 0 : i32
    %c0_i32_1 = arith.constant 0 : i32
    return %arg0, %c0_i32, %c0_i32_0 : i32, i32, i32
  }
  func.func @transform_10(%arg0: i32) -> (i32, i32, i32) {
    %c0_i32 = arith.constant 0 : i32
    %c0_i32_0 = arith.constant 0 : i32
    %c0_i32_1 = arith.constant 0 : i32
    return %arg0, %c0_i32, %c0_i32_0 : i32, i32, i32
  }
}

</mosaic_0001>

<llo_original>
// kernel: nnmf_forward.1
$region0: #{nnmf_forward.1}
  #allocation0 [shape = 'u32[]', space=smem, size = 0x4, offset = 0x4, fixed_abs, tag = 'smem constant byte address 0x4 - core index']
  #allocation1 [shape = 'u32[144,128]{1,0:T(1,128)}', space=vmem, size = 0x12000, scoped, tag = 'internal scratch']
  %s0 = inlined_call_operand.vmem [shape: f32[32,128], index: 0, kind: input, shape index: {}]
  %s1 = inlined_call_operand.vmem [shape: f32[32,128], index: 1, kind: input, shape index: {}]
  %s2 = inlined_call_operand.vmem [shape: f32[64,32], index: 2, kind: input, shape index: {}]
  %s3 = inlined_call_operand.vmem [shape: f32[64,32], index: 3, kind: input, shape index: {}]
  %s4 = inlined_call_operand.vmem [shape: f32[64,32], index: 4, kind: input, shape index: {}]
  %s5 = inlined_call_operand.vmem [shape: f32[64,1], index: 5, kind: input, shape index: {}]
  %s6 = inlined_call_operand.vmem [shape: f32[64,64], index: 6, kind: input, shape index: {}]
  %s7 = inlined_call_operand.vmem [shape: f32[64,1], index: 7, kind: input, shape index: {}]
  %s8 = inlined_call_operand.vmem [shape: f32[1,64], index: 8, kind: input, shape index: {}]
  %s9 = inlined_call_operand.vmem [shape: f32[1,1,128], index: 9, kind: input, shape index: {}]
  %s10 = inlined_call_operand.vmem [shape: f32[1,1,128], index: 10, kind: output, shape index: {}]
  %s11 = sld [smem:[#allocation0]]
  $region50: #{nnmf_forward.1} parent=0
    _
  %s13 = ssub.s32 1, %s11
  %s14 = scalar_select 0, %s13, %s11
  // Predicated region
  $region2: #{nnmf_forward.1} parent=0 // pred_check
    _
  $region3: #{nnmf_forward.1} parent=0 // pred_check_branch
    %16 = sbr.rel (0) target = $region5
  $region4: #{nnmf_forward.1} parent=0 // pred_region
    _
  $region5: #{nnmf_forward.1} parent=0 // pred_fallthru
    _
  // Predicated region
  $region6: #{nnmf_forward.1} parent=0 // pred_check
    _
  $region7: #{nnmf_forward.1} parent=0 // pred_check_branch
    %18 = sbr.rel (0) target = $region9
  $region8: #{nnmf_forward.1} parent=0 // pred_region
    _
  $region9: #{nnmf_forward.1} parent=0 // pred_fallthru
    _
  // Predicated region
  $region10: #{nnmf_forward.1} parent=0 // pred_check
    _
  $region11: #{nnmf_forward.1} parent=0 // pred_check_branch
    %20 = sbr.rel (0) target = $region13
  $region12: #{nnmf_forward.1} parent=0 // pred_region
    _
  $region13: #{nnmf_forward.1} parent=0 // pred_fallthru
    _
  // Predicated region
  $region14: #{nnmf_forward.1} parent=0 // pred_check
    _
  $region15: #{nnmf_forward.1} parent=0 // pred_check_branch
    %22 = sbr.rel (0) target = $region17
  $region16: #{nnmf_forward.1} parent=0 // pred_region
    _
  $region17: #{nnmf_forward.1} parent=0 // pred_fallthru
    _
  // Predicated region
  $region18: #{nnmf_forward.1} parent=0 // pred_check
    _
  $region19: #{nnmf_forward.1} parent=0 // pred_check_branch
    %24 = sbr.rel (0) target = $region21
  $region20: #{nnmf_forward.1} parent=0 // pred_region
    _
  $region21: #{nnmf_forward.1} parent=0 // pred_fallthru
    _
  // Predicated region
  $region22: #{nnmf_forward.1} parent=0 // pred_check
    _
  $region23: #{nnmf_forward.1} parent=0 // pred_check_branch
    %26 = sbr.rel (0) target = $region25
  $region24: #{nnmf_forward.1} parent=0 // pred_region
    _
  $region25: #{nnmf_forward.1} parent=0 // pred_fallthru
    _
  // Predicated region
  $region26: #{nnmf_forward.1} parent=0 // pred_check
    _
  $region27: #{nnmf_forward.1} parent=0 // pred_check_branch
    %28 = sbr.rel (0) target = $region29
  $region28: #{nnmf_forward.1} parent=0 // pred_region
    _
  $region29: #{nnmf_forward.1} parent=0 // pred_fallthru
    _
  // Predicated region
  $region30: #{nnmf_forward.1} parent=0 // pred_check
    _
  $region31: #{nnmf_forward.1} parent=0 // pred_check_branch
    %30 = sbr.rel (0) target = $region33
  $region32: #{nnmf_forward.1} parent=0 // pred_region
    _
  $region33: #{nnmf_forward.1} parent=0 // pred_fallthru
    _
  // Predicated region
  $region34: #{nnmf_forward.1} parent=0 // pred_check
    _
  $region35: #{nnmf_forward.1} parent=0 // pred_check_branch
    %32 = sbr.rel (0) target = $region37
  $region36: #{nnmf_forward.1} parent=0 // pred_region
    _
  $region37: #{nnmf_forward.1} parent=0 // pred_fallthru
    _
  // Predicated region
  $region38: #{nnmf_forward.1} parent=0 // pred_check
    _
  $region39: #{nnmf_forward.1} parent=0 // pred_check_branch
    %34 = sbr.rel (0) target = $region41
  $region40: #{nnmf_forward.1} parent=0 // pred_region
    _
  $region41: #{nnmf_forward.1} parent=0 // pred_fallthru
    _
  %v35 = vld [vmem:[%s0] sm:$0xff]
  %v36 = vld [vmem:[%s0 + $0x8] sm:$0xff]
  %v37 = vld [vmem:[%s0 + $0x10] sm:$0xff]
  %v38 = vld [vmem:[%s0 + $0x18] sm:$0xff]
  %v39 = vld [vmem:[%s1] sm:$0xff]
  %v40 = vld [vmem:[%s1 + $0x8] sm:$0xff]
  %v41 = vld [vmem:[%s1 + $0x10] sm:$0xff]
  %v42 = vld [vmem:[%s1 + $0x18] sm:$0xff]
  %v43 = vmul.f32 %v35, %v39
  %v44 = vmul.f32 %v36, %v40
  %v45 = vmul.f32 %v37, %v41
  %v46 = vmul.f32 %v38, %v42
  %v47 = vadd.f32 %v43, %v44
  %v48 = vadd.f32 %v47, %v45
  %v49 = vadd.f32 %v48, %v46
  %v50 = vrot.slane %v49, 4
  %v51 = vadd.f32 %v49, %v50
  %v52 = vrot.slane %v51, 2
  %v53 = vadd.f32 %v51, %v52
  %v54 = vrot.slane %v53, 1
  %v55 = vadd.f32 %v53, %v54
  %v56 = vmul.f32 %v55, 0.5
  %v57 = vld [vmem:[%s2] sm:$0xff]
  %v58 = vld [vmem:[%s2 + $0x8] sm:$0xff]
  %v59 = vld [vmem:[%s2 + $0x10] sm:$0xff]
  %v60 = vld [vmem:[%s2 + $0x18] sm:$0xff]
  %v61 = vld [vmem:[%s2 + $0x20] sm:$0xff]
  %v62 = vld [vmem:[%s2 + $0x28] sm:$0xff]
  %v63 = vld [vmem:[%s2 + $0x30] sm:$0xff]
  %v64 = vld [vmem:[%s2 + $0x38] sm:$0xff]
  %v65 = vld [vmem:[%s3] sm:$0xff]
  %v66 = vld [vmem:[%s3 + $0x8] sm:$0xff]
  %v67 = vld [vmem:[%s3 + $0x10] sm:$0xff]
  %v68 = vld [vmem:[%s3 + $0x18] sm:$0xff]
  %v69 = vld [vmem:[%s3 + $0x20] sm:$0xff]
  %v70 = vld [vmem:[%s3 + $0x28] sm:$0xff]
  %v71 = vld [vmem:[%s3 + $0x30] sm:$0xff]
  %v72 = vld [vmem:[%s3 + $0x38] sm:$0xff]
  %vm73 = vcmask 261120
  %v75 = vsel %vm73, %v65, 0
  %v78 = vsel %vm73, %v66, 0
  %v81 = vsel %vm73, %v67, 0
  %v84 = vsel %vm73, %v68, 0
  %v87 = vsel %vm73, %v69, 0
  %v90 = vsel %vm73, %v70, 0
  %v93 = vsel %vm73, %v71, 0
  %v96 = vsel %vm73, %v72, 0
  %98 = vmatprep.subr.mxu0 0.0
  %99 = vmatpush1.msra.mxu0 %v39
  %100 = vmatprep.subr.mxu0 0.0
  %101 = vmatpush1.msra.mxu0 %v40
  %102 = vmatprep.subr.mxu0 0.0
  %103 = vmatpush1.msra.mxu0 %v41
  %104 = vmatprep.subr.mxu0 0.0
  %105 = vmatpush1.msra.mxu0 %v42
  %106 = vmatprep.subr.mxu0 0.0
  %107 = vmatpush1.msra.mxu0 0.0
  %108 = vmatprep.subr.mxu0 0.0
  %109 = vmatpush1.msra.mxu0 0.0
  %110 = vmatprep.subr.mxu0 0.0
  %111 = vmatpush1.msra.mxu0 0.0
  %112 = vmatprep.subr.mxu0 0.0
  %113 = vmatpush1.msra.mxu0 0.0
  %114 = vmatprep.subr.mxu0 0.0
  %115 = vmatpush1.msra.mxu0 0.0
  %116 = vmatprep.subr.mxu0 0.0
  %117 = vmatpush1.msra.mxu0 0.0
  %118 = vmatprep.subr.mxu0 0.0
  %119 = vmatpush1.msra.mxu0 0.0
  %120 = vmatprep.subr.mxu0 0.0
  %121 = vmatpush1.msra.mxu0 0.0
  %122 = vmatprep.subr.mxu0 0.0
  %123 = vmatpush1.msra.mxu0 0.0
  %124 = vmatprep.subr.mxu0 0.0
  %125 = vmatpush1.msra.mxu0 0.0
  %126 = vmatprep.subr.mxu0 0.0
  %127 = vmatpush1.msra.mxu0 0.0
  %128 = vmatprep.subr.mxu0 0.0
  %129 = vmatpush1.msra.mxu0 0.0
  %130 = vmatprep.subr.mxu0 0.0
  %131 = vmatpush1.msra.mxu0 0.0
  %132 = vmatprep.subr.mxu0 0.0
  %133 = vmatpush1.msra.mxu0 0.0
  %134 = vmatprep.subr.mxu0 0.0
  %135 = vmatpush1.msra.mxu0 0.0
  %136 = vmatprep.subr.mxu0 0.0
  %137 = vmatpush1.msra.mxu0 0.0
  %138 = vmatprep.subr.mxu0 0.0
  %139 = vmatpush1.msra.mxu0 0.0
  %140 = vmatprep.subr.mxu0 0.0
  %141 = vmatpush1.msra.mxu0 0.0
  %142 = vmatprep.subr.mxu0 0.0
  %143 = vmatpush1.msra.mxu0 0.0
  %144 = vmatprep.subr.mxu0 0.0
  %145 = vmatpush1.msra.mxu0 0.0
  %146 = vmatprep.subr.mxu0 0.0
  %147 = vmatpush1.msra.mxu0 0.0
  %148 = vmatprep.subr.mxu0 0.0
  %149 = vmatpush1.msra.mxu0 0.0
  %150 = vmatprep.subr.mxu0 0.0
  %151 = vmatpush1.msra.mxu0 0.0
  %152 = vmatprep.subr.mxu0 0.0
  %153 = vmatpush1.msra.mxu0 0.0
  %154 = vmatprep.subr.mxu0 0.0
  %155 = vmatpush1.msra.mxu0 0.0
  %156 = vmatprep.subr.mxu0 0.0
  %157 = vmatpush1.msra.mxu0 0.0
  %158 = vmatprep.subr.mxu0 0.0
  %159 = vmatpush1.msra.mxu0 0.0
  %160 = vmatprep.subr.mxu0 0.0
  %161 = vmatpush1.msra.mxu0 0.0
  %162 = vmatprep.mubr.f32.mxu0 0.0
  %163 = vmatmul.mubr.f32.gmra.mrb[0].mxu0 %v75
  %v164 = vpop.f32.mrb[0].mxu0
  %v165 = vadd.f32 0.0, %v164
  %v166 = vpop.f32.mrb[0].mxu0
  %167 = vmatprep.mubr.f32.mxu0 0.0
  %168 = vmatmul.mubr.f32.gmra.mrb[0].mxu0 %v78
  %v169 = vpop.f32.mrb[0].mxu0
  %v170 = vadd.f32 0.0, %v169
  %v171 = vpop.f32.mrb[0].mxu0
  %172 = vmatprep.mubr.f32.mxu0 0.0
  %173 = vmatmul.mubr.f32.gmra.mrb[0].mxu0 %v81
  %v174 = vpop.f32.mrb[0].mxu0
  %v175 = vadd.f32 0.0, %v174
  %v176 = vpop.f32.mrb[0].mxu0
  %177 = vmatprep.mubr.f32.mxu0 0.0
  %178 = vmatmul.mubr.f32.gmra.mrb[0].mxu0 %v84
  %v179 = vpop.f32.mrb[0].mxu0
  %v180 = vadd.f32 0.0, %v179
  %v181 = vpop.f32.mrb[0].mxu0
  %182 = vmatprep.mubr.f32.mxu0 0.0
  %183 = vmatmul.mubr.f32.gmra.mrb[0].mxu0 %v87
  %v184 = vpop.f32.mrb[0].mxu0
  %v185 = vadd.f32 0.0, %v184
  %v186 = vpop.f32.mrb[0].mxu0
  %187 = vmatprep.mubr.f32.mxu0 0.0
  %188 = vmatmul.mubr.f32.gmra.mrb[0].mxu0 %v90
  %v189 = vpop.f32.mrb[0].mxu0
  %v190 = vadd.f32 0.0, %v189
  %v191 = vpop.f32.mrb[0].mxu0
  %192 = vmatprep.mubr.f32.mxu0 0.0
  %193 = vmatmul.mubr.f32.gmra.mrb[0].mxu0 %v93
  %v194 = vpop.f32.mrb[0].mxu0
  %v195 = vadd.f32 0.0, %v194
  %v196 = vpop.f32.mrb[0].mxu0
  %197 = vmatprep.mubr.f32.mxu0 0.0
  %198 = vmatmul.mubr.f32.gmra.mrb[0].mxu0 %v96
  %v199 = vpop.f32.mrb[0].mxu0
  %v200 = vadd.f32 0.0, %v199
  %v201 = vpop.f32.mrb[0].mxu0
  %202 = vdwg.mxu0
  %v204 = vsel %vm73, %v57, 0
  %v207 = vsel %vm73, %v58, 0
  %v210 = vsel %vm73, %v59, 0
  %v213 = vsel %vm73, %v60, 0
  %v216 = vsel %vm73, %v61, 0
  %v219 = vsel %vm73, %v62, 0
  %v222 = vsel %vm73, %v63, 0
  %v225 = vsel %vm73, %v64, 0
  %227 = vmatprep.subr.mxu0 0.0
  %228 = vmatpush1.msra.mxu0 %v35
  %229 = vmatprep.subr.mxu0 0.0
  %230 = vmatpush1.msra.mxu0 %v36
  %231 = vmatprep.subr.mxu0 0.0
  %232 = vmatpush1.msra.mxu0 %v37
  %233 = vmatprep.subr.mxu0 0.0
  %234 = vmatpush1.msra.mxu0 %v38
  %235 = vmatprep.subr.mxu0 0.0
  %236 = vmatpush1.msra.mxu0 0.0
  %237 = vmatprep.subr.mxu0 0.0
  %238 = vmatpush1.msra.mxu0 0.0
  %239 = vmatprep.subr.mxu0 0.0
  %240 = vmatpush1.msra.mxu0 0.0
  %241 = vmatprep.subr.mxu0 0.0
  %242 = vmatpush1.msra.mxu0 0.0
  %243 = vmatprep.subr.mxu0 0.0
  %244 = vmatpush1.msra.mxu0 0.0
  %245 = vmatprep.subr.mxu0 0.0
  %246 = vmatpush1.msra.mxu0 0.0
  %247 = vmatprep.subr.mxu0 0.0
  %248 = vmatpush1.msra.mxu0 0.0
  %249 = vmatprep.subr.mxu0 0.0
  %250 = vmatpush1.msra.mxu0 0.0
  %251 = vmatprep.subr.mxu0 0.0
  %252 = vmatpush1.msra.mxu0 0.0
  %253 = vmatprep.subr.mxu0 0.0
  %254 = vmatpush1.msra.mxu0 0.0
  %255 = vmatprep.subr.mxu0 0.0
  %256 = vmatpush1.msra.mxu0 0.0
  %257 = vmatprep.subr.mxu0 0.0
  %258 = vmatpush1.msra.mxu0 0.0
  %259 = vmatprep.subr.mxu0 0.0
  %260 = vmatpush1.msra.mxu0 0.0
  %261 = vmatprep.subr.mxu0 0.0
  %262 = vmatpush1.msra.mxu0 0.0
  %263 = vmatprep.subr.mxu0 0.0
  %264 = vmatpush1.msra.mxu0 0.0
  %265 = vmatprep.subr.mxu0 0.0
  %266 = vmatpush1.msra.mxu0 0.0
  %267 = vmatprep.subr.mxu0 0.0
  %268 = vmatpush1.msra.mxu0 0.0
  %269 = vmatprep.subr.mxu0 0.0
  %270 = vmatpush1.msra.mxu0 0.0
  %271 = vmatprep.subr.mxu0 0.0
  %272 = vmatpush1.msra.mxu0 0.0
  %273 = vmatprep.subr.mxu0 0.0
  %274 = vmatpush1.msra.mxu0 0.0
  %275 = vmatprep.subr.mxu0 0.0
  %276 = vmatpush1.msra.mxu0 0.0
  %277 = vmatprep.subr.mxu0 0.0
  %278 = vmatpush1.msra.mxu0 0.0
  %279 = vmatprep.subr.mxu0 0.0
  %280 = vmatpush1.msra.mxu0 0.0
  %281 = vmatprep.subr.mxu0 0.0
  %282 = vmatpush1.msra.mxu0 0.0
  %283 = vmatprep.subr.mxu0 0.0
  %284 = vmatpush1.msra.mxu0 0.0
  %285 = vmatprep.subr.mxu0 0.0
  %286 = vmatpush1.msra.mxu0 0.0
  %287 = vmatprep.subr.mxu0 0.0
  %288 = vmatpush1.msra.mxu0 0.0
  %289 = vmatprep.subr.mxu0 0.0
  %290 = vmatpush1.msra.mxu0 0.0
  %291 = vmatprep.mubr.f32.mxu0 0.0
  %292 = vmatmul.mubr.f32.gmra.mrb[0].mxu0 %v204
  %v293 = vpop.f32.mrb[0].mxu0
  %v294 = vadd.f32 %v165, %v293
  %v295 = vpop.f32.mrb[0].mxu0
  %296 = vmatprep.mubr.f32.mxu0 0.0
  %297 = vmatmul.mubr.f32.gmra.mrb[0].mxu0 %v207
  %v298 = vpop.f32.mrb[0].mxu0
  %v299 = vadd.f32 %v170, %v298
  %v300 = vpop.f32.mrb[0].mxu0
  %301 = vmatprep.mubr.f32.mxu0 0.0
  %302 = vmatmul.mubr.f32.gmra.mrb[0].mxu0 %v210
  %v303 = vpop.f32.mrb[0].mxu0
  %v304 = vadd.f32 %v175, %v303
  %v305 = vpop.f32.mrb[0].mxu0
  %306 = vmatprep.mubr.f32.mxu0 0.0
  %307 = vmatmul.mubr.f32.gmra.mrb[0].mxu0 %v213
  %v308 = vpop.f32.mrb[0].mxu0
  %v309 = vadd.f32 %v180, %v308
  %v310 = vpop.f32.mrb[0].mxu0
  %311 = vmatprep.mubr.f32.mxu0 0.0
  %312 = vmatmul.mubr.f32.gmra.mrb[0].mxu0 %v216
  %v313 = vpop.f32.mrb[0].mxu0
  %v314 = vadd.f32 %v185, %v313
  %v315 = vpop.f32.mrb[0].mxu0
  %316 = vmatprep.mubr.f32.mxu0 0.0
  %317 = vmatmul.mubr.f32.gmra.mrb[0].mxu0 %v219
  %v318 = vpop.f32.mrb[0].mxu0
  %v319 = vadd.f32 %v190, %v318
  %v320 = vpop.f32.mrb[0].mxu0
  %321 = vmatprep.mubr.f32.mxu0 0.0
  %322 = vmatmul.mubr.f32.gmra.mrb[0].mxu0 %v222
  %v323 = vpop.f32.mrb[0].mxu0
  %v324 = vadd.f32 %v195, %v323
  %v325 = vpop.f32.mrb[0].mxu0
  %326 = vmatprep.mubr.f32.mxu0 0.0
  %327 = vmatmul.mubr.f32.gmra.mrb[0].mxu0 %v225
  %v328 = vpop.f32.mrb[0].mxu0
  %v329 = vadd.f32 %v200, %v328
  %v330 = vpop.f32.mrb[0].mxu0
  %331 = vdwg.mxu0
  %v332 = vld [vmem:[%s4] sm:$0xff]
  %v333 = vld [vmem:[%s4 + $0x8] sm:$0xff]
  %v334 = vld [vmem:[%s4 + $0x10] sm:$0xff]
  %v335 = vld [vmem:[%s4 + $0x18] sm:$0xff]
  %v336 = vld [vmem:[%s4 + $0x20] sm:$0xff]
  %v337 = vld [vmem:[%s4 + $0x28] sm:$0xff]
  %v338 = vld [vmem:[%s4 + $0x30] sm:$0xff]
  %v339 = vld [vmem:[%s4 + $0x38] sm:$0xff]
  %v341 = vsel %vm73, %v332, 0
  %v344 = vsel %vm73, %v333, 0
  %v347 = vsel %vm73, %v334, 0
  %v350 = vsel %vm73, %v335, 0
  %v353 = vsel %vm73, %v336, 0
  %v356 = vsel %vm73, %v337, 0
  %v359 = vsel %vm73, %v338, 0
  %v362 = vsel %vm73, %v339, 0
  %364 = vmatprep.subr.mxu0 0.0
  %365 = vmatpush1.msra.mxu0 %v43
  %366 = vmatprep.subr.mxu0 0.0
  %367 = vmatpush1.msra.mxu0 %v44
  %368 = vmatprep.subr.mxu0 0.0
  %369 = vmatpush1.msra.mxu0 %v45
  %370 = vmatprep.subr.mxu0 0.0
  %371 = vmatpush1.msra.mxu0 %v46
  %372 = vmatprep.subr.mxu0 0.0
  %373 = vmatpush1.msra.mxu0 0.0
  %374 = vmatprep.subr.mxu0 0.0
  %375 = vmatpush1.msra.mxu0 0.0
  %376 = vmatprep.subr.mxu0 0.0
  %377 = vmatpush1.msra.mxu0 0.0
  %378 = vmatprep.subr.mxu0 0.0
  %379 = vmatpush1.msra.mxu0 0.0
  %380 = vmatprep.subr.mxu0 0.0
  %381 = vmatpush1.msra.mxu0 0.0
  %382 = vmatprep.subr.mxu0 0.0
  %383 = vmatpush1.msra.mxu0 0.0
  %384 = vmatprep.subr.mxu0 0.0
  %385 = vmatpush1.msra.mxu0 0.0
  %386 = vmatprep.subr.mxu0 0.0
  %387 = vmatpush1.msra.mxu0 0.0
  %388 = vmatprep.subr.mxu0 0.0
  %389 = vmatpush1.msra.mxu0 0.0
  %390 = vmatprep.subr.mxu0 0.0
  %391 = vmatpush1.msra.mxu0 0.0
  %392 = vmatprep.subr.mxu0 0.0
  %393 = vmatpush1.msra.mxu0 0.0
  %394 = vmatprep.subr.mxu0 0.0
  %395 = vmatpush1.msra.mxu0 0.0
  %396 = vmatprep.subr.mxu0 0.0
  %397 = vmatpush1.msra.mxu0 0.0
  %398 = vmatprep.subr.mxu0 0.0
  %399 = vmatpush1.msra.mxu0 0.0
  %400 = vmatprep.subr.mxu0 0.0
  %401 = vmatpush1.msra.mxu0 0.0
  %402 = vmatprep.subr.mxu0 0.0
  %403 = vmatpush1.msra.mxu0 0.0
  %404 = vmatprep.subr.mxu0 0.0
  %405 = vmatpush1.msra.mxu0 0.0
  %406 = vmatprep.subr.mxu0 0.0
  %407 = vmatpush1.msra.mxu0 0.0
  %408 = vmatprep.subr.mxu0 0.0
  %409 = vmatpush1.msra.mxu0 0.0
  %410 = vmatprep.subr.mxu0 0.0
  %411 = vmatpush1.msra.mxu0 0.0
  %412 = vmatprep.subr.mxu0 0.0
  %413 = vmatpush1.msra.mxu0 0.0
  %414 = vmatprep.subr.mxu0 0.0
  %415 = vmatpush1.msra.mxu0 0.0
  %416 = vmatprep.subr.mxu0 0.0
  %417 = vmatpush1.msra.mxu0 0.0
  %418 = vmatprep.subr.mxu0 0.0
  %419 = vmatpush1.msra.mxu0 0.0
  %420 = vmatprep.subr.mxu0 0.0
  %421 = vmatpush1.msra.mxu0 0.0
  %422 = vmatprep.subr.mxu0 0.0
  %423 = vmatpush1.msra.mxu0 0.0
  %424 = vmatprep.subr.mxu0 0.0
  %425 = vmatpush1.msra.mxu0 0.0
  %426 = vmatprep.subr.mxu0 0.0
  %427 = vmatpush1.msra.mxu0 0.0
  %428 = vmatprep.mubr.f32.mxu0 0.0
  %429 = vmatmul.mubr.f32.gmra.mrb[0].mxu0 %v341
  %v430 = vpop.f32.mrb[0].mxu0
  %v431 = vadd.f32 0.0, %v430
  %v432 = vpop.f32.mrb[0].mxu0
  %433 = vmatprep.mubr.f32.mxu0 0.0
  %434 = vmatmul.mubr.f32.gmra.mrb[0].mxu0 %v344
  %v435 = vpop.f32.mrb[0].mxu0
  %v436 = vadd.f32 0.0, %v435
  %v437 = vpop.f32.mrb[0].mxu0
  %438 = vmatprep.mubr.f32.mxu0 0.0
  %439 = vmatmul.mubr.f32.gmra.mrb[0].mxu0 %v347
  %v440 = vpop.f32.mrb[0].mxu0
  %v441 = vadd.f32 0.0, %v440
  %v442 = vpop.f32.mrb[0].mxu0
  %443 = vmatprep.mubr.f32.mxu0 0.0
  %444 = vmatmul.mubr.f32.gmra.mrb[0].mxu0 %v350
  %v445 = vpop.f32.mrb[0].mxu0
  %v446 = vadd.f32 0.0, %v445
  %v447 = vpop.f32.mrb[0].mxu0
  %448 = vmatprep.mubr.f32.mxu0 0.0
  %449 = vmatmul.mubr.f32.gmra.mrb[0].mxu0 %v353
  %v450 = vpop.f32.mrb[0].mxu0
  %v451 = vadd.f32 0.0, %v450
  %v452 = vpop.f32.mrb[0].mxu0
  %453 = vmatprep.mubr.f32.mxu0 0.0
  %454 = vmatmul.mubr.f32.gmra.mrb[0].mxu0 %v356
  %v455 = vpop.f32.mrb[0].mxu0
  %v456 = vadd.f32 0.0, %v455
  %v457 = vpop.f32.mrb[0].mxu0
  %458 = vmatprep.mubr.f32.mxu0 0.0
  %459 = vmatmul.mubr.f32.gmra.mrb[0].mxu0 %v359
  %v460 = vpop.f32.mrb[0].mxu0
  %v461 = vadd.f32 0.0, %v460
  %v462 = vpop.f32.mrb[0].mxu0
  %463 = vmatprep.mubr.f32.mxu0 0.0
  %464 = vmatmul.mubr.f32.gmra.mrb[0].mxu0 %v362
  %v465 = vpop.f32.mrb[0].mxu0
  %v466 = vadd.f32 0.0, %v465
  %v467 = vpop.f32.mrb[0].mxu0
  %468 = vdwg.mxu0
  %v469 = vadd.f32 %v294, %v431
  %v470 = vadd.f32 %v299, %v436
  %v471 = vadd.f32 %v304, %v441
  %v472 = vadd.f32 %v309, %v446
  %v473 = vadd.f32 %v314, %v451
  %v474 = vadd.f32 %v319, %v456
  %v475 = vadd.f32 %v324, %v461
  %v476 = vadd.f32 %v329, %v466
  %v477 = vld [vmem:[%s5] sm:$0xff]
  %v478 = vld [vmem:[%s5 + $0x8] sm:$0xff]
  %v479 = vld [vmem:[%s5 + $0x10] sm:$0xff]
  %v480 = vld [vmem:[%s5 + $0x18] sm:$0xff]
  %v481 = vld [vmem:[%s5 + $0x20] sm:$0xff]
  %v482 = vld [vmem:[%s5 + $0x28] sm:$0xff]
  %v483 = vld [vmem:[%s5 + $0x30] sm:$0xff]
  %v484 = vld [vmem:[%s5 + $0x38] sm:$0xff]
  %486 = vset.pattern.permute.xlu0 0
  %487 = vperm.xlu0 %486, %v477
  %v488 = vpop.permute.xlu0 %487
  %491 = vset.pattern.permute.xlu0 0
  %492 = vperm.xlu0 %491, %v478
  %v493 = vpop.permute.xlu0 %492
  %496 = vset.pattern.permute.xlu0 0
  %497 = vperm.xlu0 %496, %v479
  %v498 = vpop.permute.xlu0 %497
  %501 = vset.pattern.permute.xlu0 0
  %502 = vperm.xlu0 %501, %v480
  %v503 = vpop.permute.xlu0 %502
  %506 = vset.pattern.permute.xlu0 0
  %507 = vperm.xlu0 %506, %v481
  %v508 = vpop.permute.xlu0 %507
  %511 = vset.pattern.permute.xlu0 0
  %512 = vperm.xlu0 %511, %v482
  %v513 = vpop.permute.xlu0 %512
  %516 = vset.pattern.permute.xlu0 0
  %517 = vperm.xlu0 %516, %v483
  %v518 = vpop.permute.xlu0 %517
  %521 = vset.pattern.permute.xlu0 0
  %522 = vperm.xlu0 %521, %v484
  %v523 = vpop.permute.xlu0 %522
  %v525 = vadd.f32 %v469, %v488
  %v526 = vadd.f32 %v470, %v493
  %v527 = vadd.f32 %v471, %v498
  %v528 = vadd.f32 %v472, %v503
  %v529 = vadd.f32 %v473, %v508
  %v530 = vadd.f32 %v474, %v513
  %v531 = vadd.f32 %v475, %v518
  %v532 = vadd.f32 %v476, %v523
  %v533 = vtanh.pop %v525
  %v534 = vtanh.pop %v526
  %v535 = vtanh.pop %v527
  %v536 = vtanh.pop %v528
  %v537 = vtanh.pop %v529
  %v538 = vtanh.pop %v530
  %v539 = vtanh.pop %v531
  %v540 = vtanh.pop %v532
  %v541 = vld [vmem:[%s6] sm:$0xff]
  %v542 = vld [vmem:[%s6 + $0x8] sm:$0xff]
  %v543 = vld [vmem:[%s6 + $0x10] sm:$0xff]
  %v544 = vld [vmem:[%s6 + $0x18] sm:$0xff]
  %v545 = vld [vmem:[%s6 + $0x20] sm:$0xff]
  %v546 = vld [vmem:[%s6 + $0x28] sm:$0xff]
  %v547 = vld [vmem:[%s6 + $0x30] sm:$0xff]
  %v548 = vld [vmem:[%s6 + $0x38] sm:$0xff]
  %v549 = vld [vmem:[%s7] sm:$0xff]
  %v550 = vld [vmem:[%s7 + $0x8] sm:$0xff]
  %v551 = vld [vmem:[%s7 + $0x10] sm:$0xff]
  %v552 = vld [vmem:[%s7 + $0x18] sm:$0xff]
  %v553 = vld [vmem:[%s7 + $0x20] sm:$0xff]
  %v554 = vld [vmem:[%s7 + $0x28] sm:$0xff]
  %v555 = vld [vmem:[%s7 + $0x30] sm:$0xff]
  %v556 = vld [vmem:[%s7 + $0x38] sm:$0xff]
  %558 = vset.pattern.permute.xlu0 0
  %559 = vperm.xlu0 %558, %v549
  %v560 = vpop.permute.xlu0 %559
  %563 = vset.pattern.permute.xlu0 0
  %564 = vperm.xlu0 %563, %v550
  %v565 = vpop.permute.xlu0 %564
  %568 = vset.pattern.permute.xlu0 0
  %569 = vperm.xlu0 %568, %v551
  %v570 = vpop.permute.xlu0 %569
  %573 = vset.pattern.permute.xlu0 0
  %574 = vperm.xlu0 %573, %v552
  %v575 = vpop.permute.xlu0 %574
  %578 = vset.pattern.permute.xlu0 0
  %579 = vperm.xlu0 %578, %v553
  %v580 = vpop.permute.xlu0 %579
  %583 = vset.pattern.permute.xlu0 0
  %584 = vperm.xlu0 %583, %v554
  %v585 = vpop.permute.xlu0 %584
  %588 = vset.pattern.permute.xlu0 0
  %589 = vperm.xlu0 %588, %v555
  %v590 = vpop.permute.xlu0 %589
  %593 = vset.pattern.permute.xlu0 0
  %594 = vperm.xlu0 %593, %v556
  %v595 = vpop.permute.xlu0 %594
  %vm597 = vcmask 523264
  %v599 = vsel %vm597, %v541, 0
  %v602 = vsel %vm597, %v542, 0
  %v605 = vsel %vm597, %v543, 0
  %v608 = vsel %vm597, %v544, 0
  %v611 = vsel %vm597, %v545, 0
  %v614 = vsel %vm597, %v546, 0
  %v617 = vsel %vm597, %v547, 0
  %v620 = vsel %vm597, %v548, 0
  %622 = vmatprep.subr.mxu0 0.0
  %623 = vmatpush1.msra.mxu0 %v533
  %624 = vmatprep.subr.mxu0 0.0
  %625 = vmatpush1.msra.mxu0 %v534
  %626 = vmatprep.subr.mxu0 0.0
  %627 = vmatpush1.msra.mxu0 %v535
  %628 = vmatprep.subr.mxu0 0.0
  %629 = vmatpush1.msra.mxu0 %v536
  %630 = vmatprep.subr.mxu0 0.0
  %631 = vmatpush1.msra.mxu0 %v537
  %632 = vmatprep.subr.mxu0 0.0
  %633 = vmatpush1.msra.mxu0 %v538
  %634 = vmatprep.subr.mxu0 0.0
  %635 = vmatpush1.msra.mxu0 %v539
  %636 = vmatprep.subr.mxu0 0.0
  %637 = vmatpush1.msra.mxu0 %v540
  %638 = vmatprep.subr.mxu0 0.0
  %639 = vmatpush1.msra.mxu0 0.0
  %640 = vmatprep.subr.mxu0 0.0
  %641 = vmatpush1.msra.mxu0 0.0
  %642 = vmatprep.subr.mxu0 0.0
  %643 = vmatpush1.msra.mxu0 0.0
  %644 = vmatprep.subr.mxu0 0.0
  %645 = vmatpush1.msra.mxu0 0.0
  %646 = vmatprep.subr.mxu0 0.0
  %647 = vmatpush1.msra.mxu0 0.0
  %648 = vmatprep.subr.mxu0 0.0
  %649 = vmatpush1.msra.mxu0 0.0
  %650 = vmatprep.subr.mxu0 0.0
  %651 = vmatpush1.msra.mxu0 0.0
  %652 = vmatprep.subr.mxu0 0.0
  %653 = vmatpush1.msra.mxu0 0.0
  %654 = vmatprep.subr.mxu0 0.0
  %655 = vmatpush1.msra.mxu0 0.0
  %656 = vmatprep.subr.mxu0 0.0
  %657 = vmatpush1.msra.mxu0 0.0
  %658 = vmatprep.subr.mxu0 0.0
  %659 = vmatpush1.msra.mxu0 0.0
  %660 = vmatprep.subr.mxu0 0.0
  %661 = vmatpush1.msra.mxu0 0.0
  %662 = vmatprep.subr.mxu0 0.0
  %663 = vmatpush1.msra.mxu0 0.0
  %664 = vmatprep.subr.mxu0 0.0
  %665 = vmatpush1.msra.mxu0 0.0
  %666 = vmatprep.subr.mxu0 0.0
  %667 = vmatpush1.msra.mxu0 0.0
  %668 = vmatprep.subr.mxu0 0.0
  %669 = vmatpush1.msra.mxu0 0.0
  %670 = vmatprep.subr.mxu0 0.0
  %671 = vmatpush1.msra.mxu0 0.0
  %672 = vmatprep.subr.mxu0 0.0
  %673 = vmatpush1.msra.mxu0 0.0
  %674 = vmatprep.subr.mxu0 0.0
  %675 = vmatpush1.msra.mxu0 0.0
  %676 = vmatprep.subr.mxu0 0.0
  %677 = vmatpush1.msra.mxu0 0.0
  %678 = vmatprep.subr.mxu0 0.0
  %679 = vmatpush1.msra.mxu0 0.0
  %680 = vmatprep.subr.mxu0 0.0
  %681 = vmatpush1.msra.mxu0 0.0
  %682 = vmatprep.subr.mxu0 0.0
  %683 = vmatpush1.msra.mxu0 0.0
  %684 = vmatprep.subr.mxu0 0.0
  %685 = vmatpush1.msra.mxu0 0.0
  %686 = vmatprep.mubr.f32.mxu0 0.0
  %687 = vmatmul.mubr.f32.gmra.mrb[0].mxu0 %v599
  %v688 = vpop.f32.mrb[0].mxu0
  %v689 = vadd.f32 %v560, %v688
  %v690 = vpop.f32.mrb[0].mxu0
  %691 = vmatprep.mubr.f32.mxu0 0.0
  %692 = vmatmul.mubr.f32.gmra.mrb[0].mxu0 %v602
  %v693 = vpop.f32.mrb[0].mxu0
  %v694 = vadd.f32 %v565, %v693
  %v695 = vpop.f32.mrb[0].mxu0
  %696 = vmatprep.mubr.f32.mxu0 0.0
  %697 = vmatmul.mubr.f32.gmra.mrb[0].mxu0 %v605
  %v698 = vpop.f32.mrb[0].mxu0
  %v699 = vadd.f32 %v570, %v698
  %v700 = vpop.f32.mrb[0].mxu0
  %701 = vmatprep.mubr.f32.mxu0 0.0
  %702 = vmatmul.mubr.f32.gmra.mrb[0].mxu0 %v608
  %v703 = vpop.f32.mrb[0].mxu0
  %v704 = vadd.f32 %v575, %v703
  %v705 = vpop.f32.mrb[0].mxu0
  %706 = vmatprep.mubr.f32.mxu0 0.0
  %707 = vmatmul.mubr.f32.gmra.mrb[0].mxu0 %v611
  %v708 = vpop.f32.mrb[0].mxu0
  %v709 = vadd.f32 %v580, %v708
  %v710 = vpop.f32.mrb[0].mxu0
  %711 = vmatprep.mubr.f32.mxu0 0.0
  %712 = vmatmul.mubr.f32.gmra.mrb[0].mxu0 %v614
  %v713 = vpop.f32.mrb[0].mxu0
  %v714 = vadd.f32 %v585, %v713
  %v715 = vpop.f32.mrb[0].mxu0
  %716 = vmatprep.mubr.f32.mxu0 0.0
  %717 = vmatmul.mubr.f32.gmra.mrb[0].mxu0 %v617
  %v718 = vpop.f32.mrb[0].mxu0
  %v719 = vadd.f32 %v590, %v718
  %v720 = vpop.f32.mrb[0].mxu0
  %721 = vmatprep.mubr.f32.mxu0 0.0
  %722 = vmatmul.mubr.f32.gmra.mrb[0].mxu0 %v620
  %v723 = vpop.f32.mrb[0].mxu0
  %v724 = vadd.f32 %v595, %v723
  %v725 = vpop.f32.mrb[0].mxu0
  %726 = vdwg.mxu0
  %v727 = vtanh.pop %v689
  %v728 = vtanh.pop %v694
  %v729 = vtanh.pop %v699
  %v730 = vtanh.pop %v704
  %v731 = vtanh.pop %v709
  %v732 = vtanh.pop %v714
  %v733 = vtanh.pop %v719
  %v734 = vtanh.pop %v724
  %v735 = vld [vmem:[%s8] sm:$0x1]
  %v737 = vsel %vm597, %v735, 0
  %739 = vmatprep.subr.mxu0 0.0
  %740 = vmatpush1.msra.mxu0 %v727
  %741 = vmatprep.subr.mxu0 0.0
  %742 = vmatpush1.msra.mxu0 %v728
  %743 = vmatprep.subr.mxu0 0.0
  %744 = vmatpush1.msra.mxu0 %v729
  %745 = vmatprep.subr.mxu0 0.0
  %746 = vmatpush1.msra.mxu0 %v730
  %747 = vmatprep.subr.mxu0 0.0
  %748 = vmatpush1.msra.mxu0 %v731
  %749 = vmatprep.subr.mxu0 0.0
  %750 = vmatpush1.msra.mxu0 %v732
  %751 = vmatprep.subr.mxu0 0.0
  %752 = vmatpush1.msra.mxu0 %v733
  %753 = vmatprep.subr.mxu0 0.0
  %754 = vmatpush1.msra.mxu0 %v734
  %755 = vmatprep.subr.mxu0 0.0
  %756 = vmatpush1.msra.mxu0 0.0
  %757 = vmatprep.subr.mxu0 0.0
  %758 = vmatpush1.msra.mxu0 0.0
  %759 = vmatprep.subr.mxu0 0.0
  %760 = vmatpush1.msra.mxu0 0.0
  %761 = vmatprep.subr.mxu0 0.0
  %762 = vmatpush1.msra.mxu0 0.0
  %763 = vmatprep.subr.mxu0 0.0
  %764 = vmatpush1.msra.mxu0 0.0
  %765 = vmatprep.subr.mxu0 0.0
  %766 = vmatpush1.msra.mxu0 0.0
  %767 = vmatprep.subr.mxu0 0.0
  %768 = vmatpush1.msra.mxu0 0.0
  %769 = vmatprep.subr.mxu0 0.0
  %770 = vmatpush1.msra.mxu0 0.0
  %771 = vmatprep.subr.mxu0 0.0
  %772 = vmatpush1.msra.mxu0 0.0
  %773 = vmatprep.subr.mxu0 0.0
  %774 = vmatpush1.msra.mxu0 0.0
  %775 = vmatprep.subr.mxu0 0.0
  %776 = vmatpush1.msra.mxu0 0.0
  %777 = vmatprep.subr.mxu0 0.0
  %778 = vmatpush1.msra.mxu0 0.0
  %779 = vmatprep.subr.mxu0 0.0
  %780 = vmatpush1.msra.mxu0 0.0
  %781 = vmatprep.subr.mxu0 0.0
  %782 = vmatpush1.msra.mxu0 0.0
  %783 = vmatprep.subr.mxu0 0.0
  %784 = vmatpush1.msra.mxu0 0.0
  %785 = vmatprep.subr.mxu0 0.0
  %786 = vmatpush1.msra.mxu0 0.0
  %787 = vmatprep.subr.mxu0 0.0
  %788 = vmatpush1.msra.mxu0 0.0
  %789 = vmatprep.subr.mxu0 0.0
  %790 = vmatpush1.msra.mxu0 0.0
  %791 = vmatprep.subr.mxu0 0.0
  %792 = vmatpush1.msra.mxu0 0.0
  %793 = vmatprep.subr.mxu0 0.0
  %794 = vmatpush1.msra.mxu0 0.0
  %795 = vmatprep.subr.mxu0 0.0
  %796 = vmatpush1.msra.mxu0 0.0
  %797 = vmatprep.subr.mxu0 0.0
  %798 = vmatpush1.msra.mxu0 0.0
  %799 = vmatprep.subr.mxu0 0.0
  %800 = vmatpush1.msra.mxu0 0.0
  %801 = vmatprep.subr.mxu0 0.0
  %802 = vmatpush1.msra.mxu0 0.0
  %803 = vmatprep.mubr.f32.mxu0 0.0
  %804 = vmatmul.mubr.f32.gmra.mrb[0].mxu0 %v737
  %v805 = vpop.f32.mrb[0].mxu0
  %v806 = vadd.f32 0.0, %v805
  %v807 = vpop.f32.mrb[0].mxu0
  %808 = vdwg.mxu0
  %v809 = vadd.f32 %v56, %v806
  %v810 = vld [vmem:[%s9] sm:$0x1]
  %v811 = vadd.f32 %v809, %v810
  %812 = vst [vmem:[%s10] sm:$0x1] %v811
  // Predicated region
  $region42: #{nnmf_forward.1} parent=0 // pred_check
    _
  $region43: #{nnmf_forward.1} parent=0 // pred_check_branch
    %814 = sbr.rel (0) target = $region45
  $region44: #{nnmf_forward.1} parent=0 // pred_region
    _
  $region45: #{nnmf_forward.1} parent=0 // pred_fallthru
    _
  // Predicated region
  $region46: #{nnmf_forward.1} parent=0 // pred_check
    _
  $region47: #{nnmf_forward.1} parent=0 // pred_check_branch
    %816 = sbr.rel (0) target = $region49
  $region48: #{nnmf_forward.1} parent=0 // pred_region
    _
  $region49: #{nnmf_forward.1} parent=0 // pred_fallthru
    _

</llo_original>
